<compile_context>
chip_gen: v6e
topology: v6e:2x2x1
jax: 0.10.0
libtpu: 0.0.40
codegen_flags: <defaults>
</compile_context>

<pallas_src>
import math

import jax
import jax.numpy as jnp
from jax.experimental import pallas as pl
from jax.experimental.pallas import tpu as pltpu

_BN_EPS = 1e-5
_W = 64  # packed feature width for layers 2-4 (max feature width after layer 1)


def previous_power_of_two(n: int) -> int:
    return 2 ** (n.bit_length() - 1)


# ----------------------------- Pallas kernel ------------------------------- #

def _mlp_kernel(x_ref, w1_ref, wr_ref, w5_ref, b5_ref, out_ref):
    """x_ref:  (B, in_dim) input at its natural shape.
       w1_ref: (in_dim, W) layer-1 weight (zero-padded to W output lanes).
       wr_ref: (3, W, W)   layers 2-4 weights, zero-padded to W x W.
       w5_ref: (1, W)      final head weight as a row (zero-padded).
       b5_ref: (1, 1)      final head bias, SMEM scalar.
       out_ref: (B, 1)     logits."""
    inv_b = 1.0 / x_ref.shape[0]  # static batch size

    def bn_silu(z):
        # BatchNorm1d, training mode (biased stats), gamma=1 / beta=0.
        # One-pass statistics; clamp var >= 0 against cancellation.
        s1 = jnp.sum(z, axis=0, keepdims=True)
        s2 = jnp.sum(z * z, axis=0, keepdims=True)
        mean = s1 * inv_b
        var = jnp.maximum(s2 * inv_b - mean * mean, 0.0)
        zn = (z - mean) * jax.lax.rsqrt(var + _BN_EPS)
        return zn * jax.nn.sigmoid(zn)  # SiLU

    # Layer 1: natural (B, in_dim) @ (in_dim, W) -- no in-kernel or host-side padding of x.
    h = bn_silu(jnp.dot(x_ref[...], w1_ref[...], preferred_element_type=jnp.float32))

    # Layers 2-4 at a fixed W=64 lane width.  Linear biases omitted: BN's (z - mean(z))
    # cancels any per-feature bias exactly (and they are zero-initialized anyway).
    # Zero-padded lanes stay exactly zero through dot / BN / SiLU.
    for l in range(wr_ref.shape[0]):
        h = bn_silu(jnp.dot(h, wr_ref[l], preferred_element_type=jnp.float32))

    # Final Linear(latent//2, 1): VPU multiply + row-reduce instead of a 1-lane MXU pass;
    # b5 comes from SMEM as a true scalar.
    out_ref[...] = jnp.sum(h * w5_ref[...], axis=1, keepdims=True) + b5_ref[0, 0]


# ------------------------------- Wrapper ------------------------------------ #

def baseline_model_forward(x, w1, w_rest, w5_row, b5):
    """x: (B, input_dim) f32.  w1: (in_dim, W).  w_rest: (3, W, W).  w5_row: (1, W).
       b5: (1, 1) scalar bias."""
    B = x.shape[0]
    out = pl.pallas_call(
        _mlp_kernel,
        out_shape=jax.ShapeDtypeStruct((B, 1), jnp.float32),
        in_specs=[
            pl.BlockSpec(memory_space=pltpu.MemorySpace.VMEM),   # x
            pl.BlockSpec(memory_space=pltpu.MemorySpace.VMEM),   # w1
            pl.BlockSpec(memory_space=pltpu.MemorySpace.VMEM),   # w_rest
            pl.BlockSpec(memory_space=pltpu.MemorySpace.VMEM),   # w5_row
            pl.BlockSpec(memory_space=pltpu.MemorySpace.SMEM),   # b5 scalar
        ],
        out_specs=pl.BlockSpec(memory_space=pltpu.MemorySpace.VMEM),
    )(x.astype(jnp.float32), w1, w_rest, w5_row, b5)
    # .view(-1) in the PyTorch module
    return out.reshape(-1)


# --------------------------- Parameter construction ------------------------- #

def build_packed_params(key, input_dim, latent_dim=64, num_layers=1):
    """Kaiming-normal Linear weights (fan_in, gain=sqrt(2)), zero biases, BN gamma=1/beta=0,
    packed into the kernel operands.  Also returns the raw weights for the reference."""
    assert num_layers == 1, "kernel written for the default num_layers=1"
    p2 = previous_power_of_two(input_dim)
    dims = [
        (input_dim, p2),                # encoder layer 1
        (p2, p2 // 2),                  # encoder hidden layer
        (p2 // 2, latent_dim),          # encoder -> latent
        (latent_dim, latent_dim // 2),  # classifier hidden layer
        (latent_dim // 2, 1),           # classifier output
    ]
    assert p2 <= _W and all(d <= _W for pair in dims[1:] for d in pair), \
        "packer assumes all post-layer-1 feature widths <= 64"
    keys = jax.random.split(key, len(dims))

    def kaiming(k, di, do):
        # torch kaiming_normal_(weight (out,in), nonlinearity='relu', mode='fan_in'):
        # std = sqrt(2 / fan_in); stored here pre-transposed as (in, out).
        return math.sqrt(2.0 / di) * jax.random.normal(k, (di, do), jnp.float32)

    raw_ws = [kaiming(keys[i], *dims[i]) for i in range(len(dims))]

    # Layer-1 weight at natural in_dim rows, zero-padded to W output lanes.
    w1 = jnp.zeros((input_dim, _W), jnp.float32).at[:, :p2].set(raw_ws[0])

    # Layers 2-4 packed at W x W.
    w_rest = jnp.zeros((3, _W, _W), jnp.float32)
    for i in range(1, 4):
        di, do = dims[i]
        w_rest = w_rest.at[i - 1, :di, :do].set(raw_ws[i])

    # Final head: weight as a (1, W) row, bias as a (1, 1) SMEM scalar.
    w5_row = jnp.zeros((1, _W), jnp.float32).at[0, : dims[4][0]].set(raw_ws[4][:, 0])
    b5_scalar = jnp.zeros((), jnp.float32)  # init.zeros_
    b5 = jnp.full((1, 1), b5_scalar, jnp.float32)
    return w1, w_rest, w5_row, b5, raw_ws, b5_scalar


# ----------------------------- Pure-JAX reference --------------------------- #

def _reference_forward(x, raw_ws, b5):
    """Faithful (two-pass BN, explicit zero biases / gamma=1 / beta=0) reference."""
    h = x.astype(jnp.float32)
    for i in range(4):
        z = h @ raw_ws[i]  # + bias(=0)
        mean = jnp.mean(z, axis=0, keepdims=True)
        var = jnp.mean((z - mean) ** 2, axis=0, keepdims=True)
        zn = (z - mean) / jnp.sqrt(var + _BN_EPS)  # * gamma(=1) + beta(=0)
        h = zn * jax.nn.sigmoid(zn)
    return (h @ raw_ws[4] + b5).reshape(-1)


# ------------------------------------ Main ---------------------------------- #

if __name__ == "__main__":
    key = jax.random.PRNGKey(0)
    kx, kp = jax.random.split(key)

    B, INPUT_DIM, LATENT_DIM = 16, 100, 64  # previous_power_of_two(100) = 64
    x = jax.random.normal(kx, (B, INPUT_DIM), dtype=jnp.float32)
    w1, w_rest, w5_row, b5, raw_ws, b5_scalar = build_packed_params(
        kp, INPUT_DIM, LATENT_DIM, num_layers=1)

    out = jax.block_until_ready(baseline_model_forward(x, w1, w_rest, w5_row, b5))
    assert out.shape == (B,), out.shape

    ref = _reference_forward(x, raw_ws, b5_scalar)
    max_err = float(jnp.max(jnp.abs(out - ref)))
    assert jnp.allclose(out, ref, atol=1e-3, rtol=1e-3), max_err

    print("KERNEL_OK")
</pallas_src>

<mosaic_0001>
module attributes {stable_mosaic.version = 11 : i64} {
  func.func @_mlp_kernel(%arg0: memref<16x100xf32, #tpu.memory_space<vmem>>, %arg1: memref<100x64xf32, #tpu.memory_space<vmem>>, %arg2: memref<3x64x64xf32, #tpu.memory_space<vmem>>, %arg3: memref<1x64xf32, #tpu.memory_space<vmem>>, %arg4: memref<1x1xf32, #tpu.memory_space<smem>>, %arg5: memref<16x1xf32, #tpu.memory_space<vmem>>) attributes {dimension_semantics = [], scalar_prefetch = 0 : i64, scratch_operands = 0 : i64, tpu.core_type = #tpu.core_type<tc>} {
    %c0 = arith.constant 0 : index
    %c0_0 = arith.constant 0 : index
    %0 = vector.load %arg0[%c0, %c0_0] : memref<16x100xf32, #tpu.memory_space<vmem>>, vector<16x100xf32>
    %c0_1 = arith.constant 0 : index
    %c0_2 = arith.constant 0 : index
    %1 = vector.load %arg1[%c0_1, %c0_2] : memref<100x64xf32, #tpu.memory_space<vmem>>, vector<100x64xf32>
    %cst = arith.constant dense<0.000000e+00> : vector<16x64xf32>
    %2 = tpu.matmul %0, %1, %cst {dimension_numbers = #tpu.dot_dimension_numbers<[1], [0], [0], [1], [0, 0, 1, 1], [], []>} : vector<16x100xf32>, vector<100x64xf32>, vector<16x64xf32> -> vector<16x64xf32>
    %cst_3 = arith.constant dense<0.000000e+00> : vector<64xf32>
    %3 = vector.multi_reduction <add>, %2, %cst_3 [0] : vector<16x64xf32> to vector<64xf32>
    %4 = vector.shape_cast %3 : vector<64xf32> to vector<1x64xf32>
    %5 = arith.mulf %2, %2 : vector<16x64xf32>
    %cst_4 = arith.constant dense<0.000000e+00> : vector<64xf32>
    %6 = vector.multi_reduction <add>, %5, %cst_4 [0] : vector<16x64xf32> to vector<64xf32>
    %7 = vector.shape_cast %6 : vector<64xf32> to vector<1x64xf32>
    %cst_5 = arith.constant 6.250000e-02 : f32
    %8 = vector.broadcast %cst_5 : f32 to vector<1x64xf32>
    %9 = arith.mulf %4, %8 : vector<1x64xf32>
    %cst_6 = arith.constant 6.250000e-02 : f32
    %10 = vector.broadcast %cst_6 : f32 to vector<1x64xf32>
    %11 = arith.mulf %7, %10 : vector<1x64xf32>
    %12 = arith.mulf %9, %9 : vector<1x64xf32>
    %13 = arith.subf %11, %12 : vector<1x64xf32>
    %cst_7 = arith.constant 0.000000e+00 : f32
    %14 = vector.broadcast %cst_7 : f32 to vector<1x64xf32>
    %15 = arith.maximumf %13, %14 : vector<1x64xf32>
    %16 = vector.broadcast %9 : vector<1x64xf32> to vector<16x64xf32>
    %17 = arith.subf %2, %16 : vector<16x64xf32>
    %cst_8 = arith.constant 9.99999974E-6 : f32
    %18 = vector.broadcast %cst_8 : f32 to vector<1x64xf32>
    %19 = arith.addf %15, %18 : vector<1x64xf32>
    %20 = math.rsqrt %19 : vector<1x64xf32>
    %21 = vector.broadcast %20 : vector<1x64xf32> to vector<16x64xf32>
    %22 = arith.mulf %17, %21 : vector<16x64xf32>
    %23 = arith.negf %22 : vector<16x64xf32>
    %24 = math.exp %23 : vector<16x64xf32>
    %cst_9 = arith.constant 1.000000e+00 : f32
    %25 = vector.broadcast %cst_9 : f32 to vector<16x64xf32>
    %26 = arith.addf %25, %24 : vector<16x64xf32>
    %27 = arith.divf %25, %26 : vector<16x64xf32>
    %28 = arith.mulf %22, %27 : vector<16x64xf32>
    %c0_10 = arith.constant 0 : index
    %c0_11 = arith.constant 0 : index
    %c0_12 = arith.constant 0 : index
    %29 = vector.load %arg2[%c0_10, %c0_11, %c0_12] : memref<3x64x64xf32, #tpu.memory_space<vmem>>, vector<1x64x64xf32>
    %30 = vector.shape_cast %29 : vector<1x64x64xf32> to vector<64x64xf32>
    %cst_13 = arith.constant dense<0.000000e+00> : vector<16x64xf32>
    %31 = tpu.matmul %28, %30, %cst_13 {dimension_numbers = #tpu.dot_dimension_numbers<[1], [0], [0], [1], [0, 0, 1, 1], [], []>} : vector<16x64xf32>, vector<64x64xf32>, vector<16x64xf32> -> vector<16x64xf32>
    %cst_14 = arith.constant dense<0.000000e+00> : vector<64xf32>
    %32 = vector.multi_reduction <add>, %31, %cst_14 [0] : vector<16x64xf32> to vector<64xf32>
    %33 = vector.shape_cast %32 : vector<64xf32> to vector<1x64xf32>
    %34 = arith.mulf %31, %31 : vector<16x64xf32>
    %cst_15 = arith.constant dense<0.000000e+00> : vector<64xf32>
    %35 = vector.multi_reduction <add>, %34, %cst_15 [0] : vector<16x64xf32> to vector<64xf32>
    %36 = vector.shape_cast %35 : vector<64xf32> to vector<1x64xf32>
    %cst_16 = arith.constant 6.250000e-02 : f32
    %37 = vector.broadcast %cst_16 : f32 to vector<1x64xf32>
    %38 = arith.mulf %33, %37 : vector<1x64xf32>
    %cst_17 = arith.constant 6.250000e-02 : f32
    %39 = vector.broadcast %cst_17 : f32 to vector<1x64xf32>
    %40 = arith.mulf %36, %39 : vector<1x64xf32>
    %41 = arith.mulf %38, %38 : vector<1x64xf32>
    %42 = arith.subf %40, %41 : vector<1x64xf32>
    %cst_18 = arith.constant 0.000000e+00 : f32
    %43 = vector.broadcast %cst_18 : f32 to vector<1x64xf32>
    %44 = arith.maximumf %42, %43 : vector<1x64xf32>
    %45 = vector.broadcast %38 : vector<1x64xf32> to vector<16x64xf32>
    %46 = arith.subf %31, %45 : vector<16x64xf32>
    %cst_19 = arith.constant 9.99999974E-6 : f32
    %47 = vector.broadcast %cst_19 : f32 to vector<1x64xf32>
    %48 = arith.addf %44, %47 : vector<1x64xf32>
    %49 = math.rsqrt %48 : vector<1x64xf32>
    %50 = vector.broadcast %49 : vector<1x64xf32> to vector<16x64xf32>
    %51 = arith.mulf %46, %50 : vector<16x64xf32>
    %52 = arith.negf %51 : vector<16x64xf32>
    %53 = math.exp %52 : vector<16x64xf32>
    %cst_20 = arith.constant 1.000000e+00 : f32
    %54 = vector.broadcast %cst_20 : f32 to vector<16x64xf32>
    %55 = arith.addf %54, %53 : vector<16x64xf32>
    %56 = arith.divf %54, %55 : vector<16x64xf32>
    %57 = arith.mulf %51, %56 : vector<16x64xf32>
    %c1 = arith.constant 1 : index
    %c0_21 = arith.constant 0 : index
    %c0_22 = arith.constant 0 : index
    %58 = vector.load %arg2[%c1, %c0_21, %c0_22] : memref<3x64x64xf32, #tpu.memory_space<vmem>>, vector<1x64x64xf32>
    %59 = vector.shape_cast %58 : vector<1x64x64xf32> to vector<64x64xf32>
    %cst_23 = arith.constant dense<0.000000e+00> : vector<16x64xf32>
    %60 = tpu.matmul %57, %59, %cst_23 {dimension_numbers = #tpu.dot_dimension_numbers<[1], [0], [0], [1], [0, 0, 1, 1], [], []>} : vector<16x64xf32>, vector<64x64xf32>, vector<16x64xf32> -> vector<16x64xf32>
    %cst_24 = arith.constant dense<0.000000e+00> : vector<64xf32>
    %61 = vector.multi_reduction <add>, %60, %cst_24 [0] : vector<16x64xf32> to vector<64xf32>
    %62 = vector.shape_cast %61 : vector<64xf32> to vector<1x64xf32>
    %63 = arith.mulf %60, %60 : vector<16x64xf32>
    %cst_25 = arith.constant dense<0.000000e+00> : vector<64xf32>
    %64 = vector.multi_reduction <add>, %63, %cst_25 [0] : vector<16x64xf32> to vector<64xf32>
    %65 = vector.shape_cast %64 : vector<64xf32> to vector<1x64xf32>
    %cst_26 = arith.constant 6.250000e-02 : f32
    %66 = vector.broadcast %cst_26 : f32 to vector<1x64xf32>
    %67 = arith.mulf %62, %66 : vector<1x64xf32>
    %cst_27 = arith.constant 6.250000e-02 : f32
    %68 = vector.broadcast %cst_27 : f32 to vector<1x64xf32>
    %69 = arith.mulf %65, %68 : vector<1x64xf32>
    %70 = arith.mulf %67, %67 : vector<1x64xf32>
    %71 = arith.subf %69, %70 : vector<1x64xf32>
    %cst_28 = arith.constant 0.000000e+00 : f32
    %72 = vector.broadcast %cst_28 : f32 to vector<1x64xf32>
    %73 = arith.maximumf %71, %72 : vector<1x64xf32>
    %74 = vector.broadcast %67 : vector<1x64xf32> to vector<16x64xf32>
    %75 = arith.subf %60, %74 : vector<16x64xf32>
    %cst_29 = arith.constant 9.99999974E-6 : f32
    %76 = vector.broadcast %cst_29 : f32 to vector<1x64xf32>
    %77 = arith.addf %73, %76 : vector<1x64xf32>
    %78 = math.rsqrt %77 : vector<1x64xf32>
    %79 = vector.broadcast %78 : vector<1x64xf32> to vector<16x64xf32>
    %80 = arith.mulf %75, %79 : vector<16x64xf32>
    %81 = arith.negf %80 : vector<16x64xf32>
    %82 = math.exp %81 : vector<16x64xf32>
    %cst_30 = arith.constant 1.000000e+00 : f32
    %83 = vector.broadcast %cst_30 : f32 to vector<16x64xf32>
    %84 = arith.addf %83, %82 : vector<16x64xf32>
    %85 = arith.divf %83, %84 : vector<16x64xf32>
    %86 = arith.mulf %80, %85 : vector<16x64xf32>
    %c2 = arith.constant 2 : index
    %c0_31 = arith.constant 0 : index
    %c0_32 = arith.constant 0 : index
    %87 = vector.load %arg2[%c2, %c0_31, %c0_32] : memref<3x64x64xf32, #tpu.memory_space<vmem>>, vector<1x64x64xf32>
    %88 = vector.shape_cast %87 : vector<1x64x64xf32> to vector<64x64xf32>
    %cst_33 = arith.constant dense<0.000000e+00> : vector<16x64xf32>
    %89 = tpu.matmul %86, %88, %cst_33 {dimension_numbers = #tpu.dot_dimension_numbers<[1], [0], [0], [1], [0, 0, 1, 1], [], []>} : vector<16x64xf32>, vector<64x64xf32>, vector<16x64xf32> -> vector<16x64xf32>
    %cst_34 = arith.constant dense<0.000000e+00> : vector<64xf32>
    %90 = vector.multi_reduction <add>, %89, %cst_34 [0] : vector<16x64xf32> to vector<64xf32>
    %91 = vector.shape_cast %90 : vector<64xf32> to vector<1x64xf32>
    %92 = arith.mulf %89, %89 : vector<16x64xf32>
    %cst_35 = arith.constant dense<0.000000e+00> : vector<64xf32>
    %93 = vector.multi_reduction <add>, %92, %cst_35 [0] : vector<16x64xf32> to vector<64xf32>
    %94 = vector.shape_cast %93 : vector<64xf32> to vector<1x64xf32>
    %cst_36 = arith.constant 6.250000e-02 : f32
    %95 = vector.broadcast %cst_36 : f32 to vector<1x64xf32>
    %96 = arith.mulf %91, %95 : vector<1x64xf32>
    %cst_37 = arith.constant 6.250000e-02 : f32
    %97 = vector.broadcast %cst_37 : f32 to vector<1x64xf32>
    %98 = arith.mulf %94, %97 : vector<1x64xf32>
    %99 = arith.mulf %96, %96 : vector<1x64xf32>
    %100 = arith.subf %98, %99 : vector<1x64xf32>
    %cst_38 = arith.constant 0.000000e+00 : f32
    %101 = vector.broadcast %cst_38 : f32 to vector<1x64xf32>
    %102 = arith.maximumf %100, %101 : vector<1x64xf32>
    %103 = vector.broadcast %96 : vector<1x64xf32> to vector<16x64xf32>
    %104 = arith.subf %89, %103 : vector<16x64xf32>
    %cst_39 = arith.constant 9.99999974E-6 : f32
    %105 = vector.broadcast %cst_39 : f32 to vector<1x64xf32>
    %106 = arith.addf %102, %105 : vector<1x64xf32>
    %107 = math.rsqrt %106 : vector<1x64xf32>
    %108 = vector.broadcast %107 : vector<1x64xf32> to vector<16x64xf32>
    %109 = arith.mulf %104, %108 : vector<16x64xf32>
    %110 = arith.negf %109 : vector<16x64xf32>
    %111 = math.exp %110 : vector<16x64xf32>
    %cst_40 = arith.constant 1.000000e+00 : f32
    %112 = vector.broadcast %cst_40 : f32 to vector<16x64xf32>
    %113 = arith.addf %112, %111 : vector<16x64xf32>
    %114 = arith.divf %112, %113 : vector<16x64xf32>
    %115 = arith.mulf %109, %114 : vector<16x64xf32>
    %c0_41 = arith.constant 0 : index
    %c0_42 = arith.constant 0 : index
    %116 = vector.load %arg3[%c0_41, %c0_42] : memref<1x64xf32, #tpu.memory_space<vmem>>, vector<1x64xf32>
    %117 = vector.broadcast %116 : vector<1x64xf32> to vector<16x64xf32>
    %118 = arith.mulf %115, %117 : vector<16x64xf32>
    %cst_43 = arith.constant dense<0.000000e+00> : vector<16xf32>
    %119 = vector.multi_reduction <add>, %118, %cst_43 [1] : vector<16x64xf32> to vector<16xf32>
    %120 = vector.shape_cast %119 : vector<16xf32> to vector<16x1xf32>
    %c0_44 = arith.constant 0 : index
    %c0_45 = arith.constant 0 : index
    %121 = memref.load %arg4[%c0_44, %c0_45] : memref<1x1xf32, #tpu.memory_space<smem>>
    %122 = vector.broadcast %121 : f32 to vector<16x1xf32>
    %123 = arith.addf %120, %122 : vector<16x1xf32>
    %c0_46 = arith.constant 0 : index
    %c0_47 = arith.constant 0 : index
    %124 = vector.load %arg5[%c0_46, %c0_47] : memref<16x1xf32, #tpu.memory_space<vmem>>, vector<16x1xf32>
    tpu.vector_store %arg5[%c0_46, %c0_47], %123 {strides = array<i32>} : memref<16x1xf32, #tpu.memory_space<vmem>>, vector<16x1xf32>,
    return
  }
}

</mosaic_0001>

<llo_original>
// kernel: tpu_custom_call.1
$region0: #{tpu_custom_call.1}
  #allocation0 [shape = 'u32[]', space=smem, size = 0x4, offset = 0x4, fixed_abs, tag = 'smem constant byte address 0x4 - core index']
  #allocation1 [shape = 'u32[144,128]{1,0:T(1,128)}', space=vmem, size = 0x12000, scoped, tag = 'internal scratch']
  #allocation2 [shape = 'f32[1,1]{1,0:T(1,128)S(6)}', space=smem, size = 0x200, scoped, tag = 'scoped memory for tpu_custom_call.1']
  %s0 = inlined_call_operand.vmem [shape: f32[16,100], index: 0, kind: input, shape index: {}]
  %s1 = inlined_call_operand.vmem [shape: f32[100,64], index: 1, kind: input, shape index: {}]
  %s2 = inlined_call_operand.hbm [shape: f32[3,64,64], index: 2, kind: input, shape index: {}]
  %s3 = inlined_call_operand.vmem [shape: f32[1,64], index: 3, kind: input, shape index: {}]
  %s4 = inlined_call_operand.<no memory space> [shape: f32[1,1], index: 4, kind: input, shape index: {}]
  %s5 = inlined_call_operand.vmem [shape: f32[16,1], index: 5, kind: output, shape index: {}]
  %s6 = sld [smem:[#allocation0]]
  $region34: #{tpu_custom_call.1} parent=0
    _
  %s8 = ssub.s32 1, %s6
  %s9 = scalar_select 0, %s8, %s6
  %10 = sst [smem:[#allocation2]] %s4
  $region1: #{tpu_custom_call.1} parent=0
    #allocation3 [shape = 'u8[98304]{0}', space=vmem, size = 0x18000, scoped, tag = 'input window, operand 2, single buffered']
    #allocation4 [shape = 's32[1]{0}', space=sflag, size = 0x4, scoped, tag = 'scoped memory for tpu_custom_call.1']
    %11 = vsyncpa [#allocation4], 0
    // Predicated region
    $region2: #{tpu_custom_call.1} parent=1 // pred_check
      _
    $region3: #{tpu_custom_call.1} parent=1 // pred_check_branch
      %13 = sbr.rel (0) target = $region5
    $region4: #{tpu_custom_call.1} parent=1 // pred_region
      _
    $region5: #{tpu_custom_call.1} parent=1 // pred_fallthru
      _
    // Predicated region
    $region6: #{tpu_custom_call.1} parent=1 // pred_check
      _
    $region7: #{tpu_custom_call.1} parent=1 // pred_check_branch
      %15 = sbr.rel (0) target = $region9
    $region8: #{tpu_custom_call.1} parent=1 // pred_region
      _
    $region9: #{tpu_custom_call.1} parent=1 // pred_fallthru
      _
    // Predicated region
    $region10: #{tpu_custom_call.1} parent=1 // pred_check
      _
    $region11: #{tpu_custom_call.1} parent=1 // pred_check_branch
      %17 = sbr.rel (0) target = $region13
    $region12: #{tpu_custom_call.1} parent=1 // pred_region
      %s19 = ssub.s32 3072, 3072
      %20 = vsyncadd [#allocation4], %s19
      %s21 = sshll.u32 [#allocation3], 4
      %s22 = int_to_ptr.vmem [resolvable:$true] %s21
      %27 = dma.hbm_to_vmem [thread:$0]  %s2, 3072, %s22, [#allocation4], 128, 128, 8
    $region13: #{tpu_custom_call.1} parent=1 // pred_fallthru
      _
    // Predicated region
    $region14: #{tpu_custom_call.1} parent=1 // pred_check
      _
    $region15: #{tpu_custom_call.1} parent=1 // pred_check_branch
      %29 = sbr.rel (0) target = $region17
    $region16: #{tpu_custom_call.1} parent=1 // pred_region
      _
    $region17: #{tpu_custom_call.1} parent=1 // pred_fallthru
      _
    // Predicated region
    $region18: #{tpu_custom_call.1} parent=1 // pred_check
      _
    $region19: #{tpu_custom_call.1} parent=1 // pred_check_branch
      %31 = sbr.rel (0) target = $region21
    $region20: #{tpu_custom_call.1} parent=1 // pred_region
      _
    $region21: #{tpu_custom_call.1} parent=1 // pred_fallthru
      _
    // Predicated region
    $region22: #{tpu_custom_call.1} parent=1 // pred_check
      _
    $region23: #{tpu_custom_call.1} parent=1 // pred_check_branch
      %33 = sbr.rel (0) target = $region25
    $region24: #{tpu_custom_call.1} parent=1 // pred_region
      %34 = dma.done [#allocation4], 3072
    $region25: #{tpu_custom_call.1} parent=1 // pred_fallthru
      _
    %v35 = vld [vmem:[%s0] sm:$0xff]
    %v36 = vld [vmem:[%s0 + $0x8] sm:$0xff]
    %v37 = vld [vmem:[%s1] sm:$0xff]
    %v38 = vld [vmem:[%s1 + $0x8] sm:$0xff]
    %v39 = vld [vmem:[%s1 + $0x10] sm:$0xff]
    %v40 = vld [vmem:[%s1 + $0x18] sm:$0xff]
    %v41 = vld [vmem:[%s1 + $0x20] sm:$0xff]
    %v42 = vld [vmem:[%s1 + $0x28] sm:$0xff]
    %v43 = vld [vmem:[%s1 + $0x30] sm:$0xff]
    %v44 = vld [vmem:[%s1 + $0x38] sm:$0xff]
    %v45 = vld [vmem:[%s1 + $0x40] sm:$0xff]
    %v46 = vld [vmem:[%s1 + $0x48] sm:$0xff]
    %v47 = vld [vmem:[%s1 + $0x50] sm:$0xff]
    %v48 = vld [vmem:[%s1 + $0x58] sm:$0xff]
    %v49 = vld [vmem:[%s1 + $0x60] sm:$0xf]
    %vm50 = vcmask 818176
    %v52 = vsel %vm50, %v35, 0
    %v55 = vsel %vm50, %v36, 0
    %vm57 = vcmask 1043456
    %v59 = vsel %vm57, %v49, 0
    %61 = vmatprep.subr.mxu0 0.0
    %62 = vmatpush1.msra.mxu0 0.0
    %63 = vmatprep.subr.mxu0 0.0
    %64 = vmatpush1.msra.mxu0 0.0
    %65 = vmatprep.subr.mxu0 0.0
    %66 = vmatpush1.msra.mxu0 0.0
    %67 = vmatprep.subr.mxu0 0.0
    %68 = vmatpush1.msra.mxu0 %v59
    %69 = vmatprep.subr.mxu0 0.0
    %70 = vmatpush1.msra.mxu0 %v48
    %71 = vmatprep.subr.mxu0 0.0
    %72 = vmatpush1.msra.mxu0 %v47
    %73 = vmatprep.subr.mxu0 0.0
    %74 = vmatpush1.msra.mxu0 %v46
    %75 = vmatprep.subr.mxu0 0.0
    %76 = vmatpush1.msra.mxu0 %v45
    %77 = vmatprep.subr.mxu0 0.0
    %78 = vmatpush1.msra.mxu0 %v44
    %79 = vmatprep.subr.mxu0 0.0
    %80 = vmatpush1.msra.mxu0 %v43
    %81 = vmatprep.subr.mxu0 0.0
    %82 = vmatpush1.msra.mxu0 %v42
    %83 = vmatprep.subr.mxu0 0.0
    %84 = vmatpush1.msra.mxu0 %v41
    %85 = vmatprep.subr.mxu0 0.0
    %86 = vmatpush1.msra.mxu0 %v40
    %87 = vmatprep.subr.mxu0 0.0
    %88 = vmatpush1.msra.mxu0 %v39
    %89 = vmatprep.subr.mxu0 0.0
    %90 = vmatpush1.msra.mxu0 %v38
    %91 = vmatprep.subr.mxu0 0.0
    %92 = vmatpush1.msra.mxu0 %v37
    %93 = vmatprep.subr.mxu0 0.0
    %94 = vmatpush2.msra.mxu0 0.0
    %95 = vmatprep.subr.mxu0 0.0
    %96 = vmatpush2.msra.mxu0 0.0
    %97 = vmatprep.subr.mxu0 0.0
    %98 = vmatpush2.msra.mxu0 0.0
    %99 = vmatprep.subr.mxu0 0.0
    %100 = vmatpush2.msra.mxu0 0.0
    %101 = vmatprep.subr.mxu0 0.0
    %102 = vmatpush2.msra.mxu0 0.0
    %103 = vmatprep.subr.mxu0 0.0
    %104 = vmatpush2.msra.mxu0 0.0
    %105 = vmatprep.subr.mxu0 0.0
    %106 = vmatpush2.msra.mxu0 0.0
    %107 = vmatprep.subr.mxu0 0.0
    %108 = vmatpush2.msra.mxu0 0.0
    %109 = vmatprep.subr.mxu0 0.0
    %110 = vmatpush2.msra.mxu0 0.0
    %111 = vmatprep.subr.mxu0 0.0
    %112 = vmatpush2.msra.mxu0 0.0
    %113 = vmatprep.subr.mxu0 0.0
    %114 = vmatpush2.msra.mxu0 0.0
    %115 = vmatprep.subr.mxu0 0.0
    %116 = vmatpush2.msra.mxu0 0.0
    %117 = vmatprep.subr.mxu0 0.0
    %118 = vmatpush2.msra.mxu0 0.0
    %119 = vmatprep.subr.mxu0 0.0
    %120 = vmatpush2.msra.mxu0 0.0
    %121 = vmatprep.subr.mxu0 0.0
    %122 = vmatpush2.msra.mxu0 0.0
    %123 = vmatprep.subr.mxu0 0.0
    %124 = vmatpush2.msra.mxu0 0.0
    %125 = vmatprep.mubr.f32.mxu0 0.0
    %126 = vmatmul.mubr.f32.gmra.mxu0 %v52
    %v127 = vpop.f32.mrf.mxu0
    %v128 = vadd.f32 0.0, %v127
    %v129 = vpop.f32.mrf.mxu0
    %130 = vmatprep.mubr.f32.mxu0 0.0
    %131 = vmatmul.mubr.f32.gmra.mxu0 %v55
    %v132 = vpop.f32.mrf.mxu0
    %v133 = vadd.f32 0.0, %v132
    %v134 = vpop.f32.mrf.mxu0
    %135 = vdwg.mxu0
    %vm136 = vcmask 523264
    %v137 = vsel %vm136, %v128, 0.0
    %v138 = vsel %vm136, %v133, 0.0
    %v139 = vadd.f32 %v137, %v138
    %v140 = vrot.slane %v139, 4
    %v141 = vadd.f32 %v139, %v140
    %v142 = vrot.slane %v141, 2
    %v143 = vadd.f32 %v141, %v142
    %v144 = vrot.slane %v143, 1
    %v145 = vadd.f32 %v143, %v144
    %v146 = vmul.f32 %v128, %v128
    %v147 = vmul.f32 %v133, %v133
    %v148 = vsel %vm136, %v146, 0.0
    %v149 = vsel %vm136, %v147, 0.0
    %v150 = vadd.f32 %v148, %v149
    %v151 = vrot.slane %v150, 4
    %v152 = vadd.f32 %v150, %v151
    %v153 = vrot.slane %v152, 2
    %v154 = vadd.f32 %v152, %v153
    %v155 = vrot.slane %v154, 1
    %v156 = vadd.f32 %v154, %v155
    %v157 = vmul.f32 %v145, 0.0625
    %v158 = vmul.f32 %v156, 0.0625
    %v159 = vmul.f32 %v157, %v157
    %v160 = vsub.f32 %v158, %v159
    %v161 = vmax.f32 %v160, 0.0
    %v162 = vsub.f32 %v128, %v157
    %v163 = vsub.f32 %v133, %v157
    %v164 = vadd.f32 %v161, 1e-05
    %v165 = vrsqrt.pop %v164
    %v166 = vmul.f32 %v162, %v165
    %v167 = vmul.f32 %v163, %v165
    %v168 = vxor.u32 %v166, 2147483648
    %v169 = vxor.u32 %v167, 2147483648
    %v170 = vmul.f32 %v168, 1.442695
    %v171 = vpow.pop %v170
    %v172 = vmul.f32 %v169, 1.442695
    %v173 = vpow.pop %v172
    %v174 = vadd.f32 %v171, 1.0
    %v175 = vadd.f32 %v173, 1.0
    %v176 = vrcp.pop %v174
    %v177 = vmul.f32 1.0, %v176
    %v178 = vrcp.pop %v175
    %v179 = vmul.f32 1.0, %v178
    %v180 = vmul.f32 %v166, %v177
    %v181 = vmul.f32 %v167, %v179
    %v182 = vld [vmem:[#allocation3] sm:$0xff]
    %v183 = vld [vmem:[#allocation3 + $0x8] sm:$0xff]
    %v184 = vld [vmem:[#allocation3 + $0x10] sm:$0xff]
    %v185 = vld [vmem:[#allocation3 + $0x18] sm:$0xff]
    %v186 = vld [vmem:[#allocation3 + $0x20] sm:$0xff]
    %v187 = vld [vmem:[#allocation3 + $0x28] sm:$0xff]
    %v188 = vld [vmem:[#allocation3 + $0x30] sm:$0xff]
    %v189 = vld [vmem:[#allocation3 + $0x38] sm:$0xff]
    %v191 = vsel %vm136, %v180, 0
    %v194 = vsel %vm136, %v181, 0
    %196 = vmatprep.subr.mxu0 0.0
    %197 = vmatpush1.msra.mxu0 0.0
    %198 = vmatprep.subr.mxu0 0.0
    %199 = vmatpush1.msra.mxu0 0.0
    %200 = vmatprep.subr.mxu0 0.0
    %201 = vmatpush1.msra.mxu0 0.0
    %202 = vmatprep.subr.mxu0 0.0
    %203 = vmatpush1.msra.mxu0 0.0
    %204 = vmatprep.subr.mxu0 0.0
    %205 = vmatpush1.msra.mxu0 0.0
    %206 = vmatprep.subr.mxu0 0.0
    %207 = vmatpush1.msra.mxu0 0.0
    %208 = vmatprep.subr.mxu0 0.0
    %209 = vmatpush1.msra.mxu0 0.0
    %210 = vmatprep.subr.mxu0 0.0
    %211 = vmatpush1.msra.mxu0 0.0
    %212 = vmatprep.subr.mxu0 0.0
    %213 = vmatpush1.msra.mxu0 %v189
    %214 = vmatprep.subr.mxu0 0.0
    %215 = vmatpush1.msra.mxu0 %v188
    %216 = vmatprep.subr.mxu0 0.0
    %217 = vmatpush1.msra.mxu0 %v187
    %218 = vmatprep.subr.mxu0 0.0
    %219 = vmatpush1.msra.mxu0 %v186
    %220 = vmatprep.subr.mxu0 0.0
    %221 = vmatpush1.msra.mxu0 %v185
    %222 = vmatprep.subr.mxu0 0.0
    %223 = vmatpush1.msra.mxu0 %v184
    %224 = vmatprep.subr.mxu0 0.0
    %225 = vmatpush1.msra.mxu0 %v183
    %226 = vmatprep.subr.mxu0 0.0
    %227 = vmatpush1.msra.mxu0 %v182
    %228 = vmatprep.subr.mxu0 0.0
    %229 = vmatpush2.msra.mxu0 0.0
    %230 = vmatprep.subr.mxu0 0.0
    %231 = vmatpush2.msra.mxu0 0.0
    %232 = vmatprep.subr.mxu0 0.0
    %233 = vmatpush2.msra.mxu0 0.0
    %234 = vmatprep.subr.mxu0 0.0
    %235 = vmatpush2.msra.mxu0 0.0
    %236 = vmatprep.subr.mxu0 0.0
    %237 = vmatpush2.msra.mxu0 0.0
    %238 = vmatprep.subr.mxu0 0.0
    %239 = vmatpush2.msra.mxu0 0.0
    %240 = vmatprep.subr.mxu0 0.0
    %241 = vmatpush2.msra.mxu0 0.0
    %242 = vmatprep.subr.mxu0 0.0
    %243 = vmatpush2.msra.mxu0 0.0
    %244 = vmatprep.subr.mxu0 0.0
    %245 = vmatpush2.msra.mxu0 0.0
    %246 = vmatprep.subr.mxu0 0.0
    %247 = vmatpush2.msra.mxu0 0.0
    %248 = vmatprep.subr.mxu0 0.0
    %249 = vmatpush2.msra.mxu0 0.0
    %250 = vmatprep.subr.mxu0 0.0
    %251 = vmatpush2.msra.mxu0 0.0
    %252 = vmatprep.subr.mxu0 0.0
    %253 = vmatpush2.msra.mxu0 0.0
    %254 = vmatprep.subr.mxu0 0.0
    %255 = vmatpush2.msra.mxu0 0.0
    %256 = vmatprep.subr.mxu0 0.0
    %257 = vmatpush2.msra.mxu0 0.0
    %258 = vmatprep.subr.mxu0 0.0
    %259 = vmatpush2.msra.mxu0 0.0
    %260 = vmatprep.mubr.f32.mxu0 0.0
    %261 = vmatmul.mubr.f32.gmra.mxu0 %v191
    %v262 = vpop.f32.mrf.mxu0
    %v263 = vadd.f32 0.0, %v262
    %v264 = vpop.f32.mrf.mxu0
    %265 = vmatprep.mubr.f32.mxu0 0.0
    %266 = vmatmul.mubr.f32.gmra.mxu0 %v194
    %v267 = vpop.f32.mrf.mxu0
    %v268 = vadd.f32 0.0, %v267
    %v269 = vpop.f32.mrf.mxu0
    %270 = vdwg.mxu0
    %v271 = vsel %vm136, %v263, 0.0
    %v272 = vsel %vm136, %v268, 0.0
    %v273 = vadd.f32 %v271, %v272
    %v274 = vrot.slane %v273, 4
    %v275 = vadd.f32 %v273, %v274
    %v276 = vrot.slane %v275, 2
    %v277 = vadd.f32 %v275, %v276
    %v278 = vrot.slane %v277, 1
    %v279 = vadd.f32 %v277, %v278
    %v280 = vmul.f32 %v263, %v263
    %v281 = vmul.f32 %v268, %v268
    %v282 = vsel %vm136, %v280, 0.0
    %v283 = vsel %vm136, %v281, 0.0
    %v284 = vadd.f32 %v282, %v283
    %v285 = vrot.slane %v284, 4
    %v286 = vadd.f32 %v284, %v285
    %v287 = vrot.slane %v286, 2
    %v288 = vadd.f32 %v286, %v287
    %v289 = vrot.slane %v288, 1
    %v290 = vadd.f32 %v288, %v289
    %v291 = vmul.f32 %v279, 0.0625
    %v292 = vmul.f32 %v290, 0.0625
    %v293 = vmul.f32 %v291, %v291
    %v294 = vsub.f32 %v292, %v293
    %v295 = vmax.f32 %v294, 0.0
    %v296 = vsub.f32 %v263, %v291
    %v297 = vsub.f32 %v268, %v291
    %v298 = vadd.f32 %v295, 1e-05
    %v299 = vrsqrt.pop %v298
    %v300 = vmul.f32 %v296, %v299
    %v301 = vmul.f32 %v297, %v299
    %v302 = vxor.u32 %v300, 2147483648
    %v303 = vxor.u32 %v301, 2147483648
    %v304 = vmul.f32 %v302, 1.442695
    %v305 = vpow.pop %v304
    %v306 = vmul.f32 %v303, 1.442695
    %v307 = vpow.pop %v306
    %v308 = vadd.f32 %v305, 1.0
    %v309 = vadd.f32 %v307, 1.0
    %v310 = vrcp.pop %v308
    %v311 = vmul.f32 1.0, %v310
    %v312 = vrcp.pop %v309
    %v313 = vmul.f32 1.0, %v312
    %v314 = vmul.f32 %v300, %v311
    %v315 = vmul.f32 %v301, %v313
    %s316 = scalar_lea.vmem [#allocation3], 64
    %v317 = vld [vmem:[%s316] sm:$0xff]
    %v318 = vld [vmem:[%s316 + $0x8] sm:$0xff]
    %v319 = vld [vmem:[%s316 + $0x10] sm:$0xff]
    %v320 = vld [vmem:[%s316 + $0x18] sm:$0xff]
    %v321 = vld [vmem:[%s316 + $0x20] sm:$0xff]
    %v322 = vld [vmem:[%s316 + $0x28] sm:$0xff]
    %v323 = vld [vmem:[%s316 + $0x30] sm:$0xff]
    %v324 = vld [vmem:[%s316 + $0x38] sm:$0xff]
    %v326 = vsel %vm136, %v314, 0
    %v329 = vsel %vm136, %v315, 0
    %331 = vmatprep.subr.mxu0 0.0
    %332 = vmatpush1.msra.mxu0 0.0
    %333 = vmatprep.subr.mxu0 0.0
    %334 = vmatpush1.msra.mxu0 0.0
    %335 = vmatprep.subr.mxu0 0.0
    %336 = vmatpush1.msra.mxu0 0.0
    %337 = vmatprep.subr.mxu0 0.0
    %338 = vmatpush1.msra.mxu0 0.0
    %339 = vmatprep.subr.mxu0 0.0
    %340 = vmatpush1.msra.mxu0 0.0
    %341 = vmatprep.subr.mxu0 0.0
    %342 = vmatpush1.msra.mxu0 0.0
    %343 = vmatprep.subr.mxu0 0.0
    %344 = vmatpush1.msra.mxu0 0.0
    %345 = vmatprep.subr.mxu0 0.0
    %346 = vmatpush1.msra.mxu0 0.0
    %347 = vmatprep.subr.mxu0 0.0
    %348 = vmatpush1.msra.mxu0 %v324
    %349 = vmatprep.subr.mxu0 0.0
    %350 = vmatpush1.msra.mxu0 %v323
    %351 = vmatprep.subr.mxu0 0.0
    %352 = vmatpush1.msra.mxu0 %v322
    %353 = vmatprep.subr.mxu0 0.0
    %354 = vmatpush1.msra.mxu0 %v321
    %355 = vmatprep.subr.mxu0 0.0
    %356 = vmatpush1.msra.mxu0 %v320
    %357 = vmatprep.subr.mxu0 0.0
    %358 = vmatpush1.msra.mxu0 %v319
    %359 = vmatprep.subr.mxu0 0.0
    %360 = vmatpush1.msra.mxu0 %v318
    %361 = vmatprep.subr.mxu0 0.0
    %362 = vmatpush1.msra.mxu0 %v317
    %363 = vmatprep.subr.mxu0 0.0
    %364 = vmatpush2.msra.mxu0 0.0
    %365 = vmatprep.subr.mxu0 0.0
    %366 = vmatpush2.msra.mxu0 0.0
    %367 = vmatprep.subr.mxu0 0.0
    %368 = vmatpush2.msra.mxu0 0.0
    %369 = vmatprep.subr.mxu0 0.0
    %370 = vmatpush2.msra.mxu0 0.0
    %371 = vmatprep.subr.mxu0 0.0
    %372 = vmatpush2.msra.mxu0 0.0
    %373 = vmatprep.subr.mxu0 0.0
    %374 = vmatpush2.msra.mxu0 0.0
    %375 = vmatprep.subr.mxu0 0.0
    %376 = vmatpush2.msra.mxu0 0.0
    %377 = vmatprep.subr.mxu0 0.0
    %378 = vmatpush2.msra.mxu0 0.0
    %379 = vmatprep.subr.mxu0 0.0
    %380 = vmatpush2.msra.mxu0 0.0
    %381 = vmatprep.subr.mxu0 0.0
    %382 = vmatpush2.msra.mxu0 0.0
    %383 = vmatprep.subr.mxu0 0.0
    %384 = vmatpush2.msra.mxu0 0.0
    %385 = vmatprep.subr.mxu0 0.0
    %386 = vmatpush2.msra.mxu0 0.0
    %387 = vmatprep.subr.mxu0 0.0
    %388 = vmatpush2.msra.mxu0 0.0
    %389 = vmatprep.subr.mxu0 0.0
    %390 = vmatpush2.msra.mxu0 0.0
    %391 = vmatprep.subr.mxu0 0.0
    %392 = vmatpush2.msra.mxu0 0.0
    %393 = vmatprep.subr.mxu0 0.0
    %394 = vmatpush2.msra.mxu0 0.0
    %395 = vmatprep.mubr.f32.mxu0 0.0
    %396 = vmatmul.mubr.f32.gmra.mxu0 %v326
    %v397 = vpop.f32.mrf.mxu0
    %v398 = vadd.f32 0.0, %v397
    %v399 = vpop.f32.mrf.mxu0
    %400 = vmatprep.mubr.f32.mxu0 0.0
    %401 = vmatmul.mubr.f32.gmra.mxu0 %v329
    %v402 = vpop.f32.mrf.mxu0
    %v403 = vadd.f32 0.0, %v402
    %v404 = vpop.f32.mrf.mxu0
    %405 = vdwg.mxu0
    %v406 = vsel %vm136, %v398, 0.0
    %v407 = vsel %vm136, %v403, 0.0
    %v408 = vadd.f32 %v406, %v407
    %v409 = vrot.slane %v408, 4
    %v410 = vadd.f32 %v408, %v409
    %v411 = vrot.slane %v410, 2
    %v412 = vadd.f32 %v410, %v411
    %v413 = vrot.slane %v412, 1
    %v414 = vadd.f32 %v412, %v413
    %v415 = vmul.f32 %v398, %v398
    %v416 = vmul.f32 %v403, %v403
    %v417 = vsel %vm136, %v415, 0.0
    %v418 = vsel %vm136, %v416, 0.0
    %v419 = vadd.f32 %v417, %v418
    %v420 = vrot.slane %v419, 4
    %v421 = vadd.f32 %v419, %v420
    %v422 = vrot.slane %v421, 2
    %v423 = vadd.f32 %v421, %v422
    %v424 = vrot.slane %v423, 1
    %v425 = vadd.f32 %v423, %v424
    %v426 = vmul.f32 %v414, 0.0625
    %v427 = vmul.f32 %v425, 0.0625
    %v428 = vmul.f32 %v426, %v426
    %v429 = vsub.f32 %v427, %v428
    %v430 = vmax.f32 %v429, 0.0
    %v431 = vsub.f32 %v398, %v426
    %v432 = vsub.f32 %v403, %v426
    %v433 = vadd.f32 %v430, 1e-05
    %v434 = vrsqrt.pop %v433
    %v435 = vmul.f32 %v431, %v434
    %v436 = vmul.f32 %v432, %v434
    %v437 = vxor.u32 %v435, 2147483648
    %v438 = vxor.u32 %v436, 2147483648
    %v439 = vmul.f32 %v437, 1.442695
    %v440 = vpow.pop %v439
    %v441 = vmul.f32 %v438, 1.442695
    %v442 = vpow.pop %v441
    %v443 = vadd.f32 %v440, 1.0
    %v444 = vadd.f32 %v442, 1.0
    %v445 = vrcp.pop %v443
    %v446 = vmul.f32 1.0, %v445
    %v447 = vrcp.pop %v444
    %v448 = vmul.f32 1.0, %v447
    %v449 = vmul.f32 %v435, %v446
    %v450 = vmul.f32 %v436, %v448
    %s451 = scalar_lea.vmem [#allocation3], 128
    %v452 = vld [vmem:[%s451] sm:$0xff]
    %v453 = vld [vmem:[%s451 + $0x8] sm:$0xff]
    %v454 = vld [vmem:[%s451 + $0x10] sm:$0xff]
    %v455 = vld [vmem:[%s451 + $0x18] sm:$0xff]
    %v456 = vld [vmem:[%s451 + $0x20] sm:$0xff]
    %v457 = vld [vmem:[%s451 + $0x28] sm:$0xff]
    %v458 = vld [vmem:[%s451 + $0x30] sm:$0xff]
    %v459 = vld [vmem:[%s451 + $0x38] sm:$0xff]
    %v461 = vsel %vm136, %v449, 0
    %v464 = vsel %vm136, %v450, 0
    %466 = vmatprep.subr.mxu0 0.0
    %467 = vmatpush1.msra.mxu0 0.0
    %468 = vmatprep.subr.mxu0 0.0
    %469 = vmatpush1.msra.mxu0 0.0
    %470 = vmatprep.subr.mxu0 0.0
    %471 = vmatpush1.msra.mxu0 0.0
    %472 = vmatprep.subr.mxu0 0.0
    %473 = vmatpush1.msra.mxu0 0.0
    %474 = vmatprep.subr.mxu0 0.0
    %475 = vmatpush1.msra.mxu0 0.0
    %476 = vmatprep.subr.mxu0 0.0
    %477 = vmatpush1.msra.mxu0 0.0
    %478 = vmatprep.subr.mxu0 0.0
    %479 = vmatpush1.msra.mxu0 0.0
    %480 = vmatprep.subr.mxu0 0.0
    %481 = vmatpush1.msra.mxu0 0.0
    %482 = vmatprep.subr.mxu0 0.0
    %483 = vmatpush1.msra.mxu0 %v459
    %484 = vmatprep.subr.mxu0 0.0
    %485 = vmatpush1.msra.mxu0 %v458
    %486 = vmatprep.subr.mxu0 0.0
    %487 = vmatpush1.msra.mxu0 %v457
    %488 = vmatprep.subr.mxu0 0.0
    %489 = vmatpush1.msra.mxu0 %v456
    %490 = vmatprep.subr.mxu0 0.0
    %491 = vmatpush1.msra.mxu0 %v455
    %492 = vmatprep.subr.mxu0 0.0
    %493 = vmatpush1.msra.mxu0 %v454
    %494 = vmatprep.subr.mxu0 0.0
    %495 = vmatpush1.msra.mxu0 %v453
    %496 = vmatprep.subr.mxu0 0.0
    %497 = vmatpush1.msra.mxu0 %v452
    %498 = vmatprep.subr.mxu0 0.0
    %499 = vmatpush2.msra.mxu0 0.0
    %500 = vmatprep.subr.mxu0 0.0
    %501 = vmatpush2.msra.mxu0 0.0
    %502 = vmatprep.subr.mxu0 0.0
    %503 = vmatpush2.msra.mxu0 0.0
    %504 = vmatprep.subr.mxu0 0.0
    %505 = vmatpush2.msra.mxu0 0.0
    %506 = vmatprep.subr.mxu0 0.0
    %507 = vmatpush2.msra.mxu0 0.0
    %508 = vmatprep.subr.mxu0 0.0
    %509 = vmatpush2.msra.mxu0 0.0
    %510 = vmatprep.subr.mxu0 0.0
    %511 = vmatpush2.msra.mxu0 0.0
    %512 = vmatprep.subr.mxu0 0.0
    %513 = vmatpush2.msra.mxu0 0.0
    %514 = vmatprep.subr.mxu0 0.0
    %515 = vmatpush2.msra.mxu0 0.0
    %516 = vmatprep.subr.mxu0 0.0
    %517 = vmatpush2.msra.mxu0 0.0
    %518 = vmatprep.subr.mxu0 0.0
    %519 = vmatpush2.msra.mxu0 0.0
    %520 = vmatprep.subr.mxu0 0.0
    %521 = vmatpush2.msra.mxu0 0.0
    %522 = vmatprep.subr.mxu0 0.0
    %523 = vmatpush2.msra.mxu0 0.0
    %524 = vmatprep.subr.mxu0 0.0
    %525 = vmatpush2.msra.mxu0 0.0
    %526 = vmatprep.subr.mxu0 0.0
    %527 = vmatpush2.msra.mxu0 0.0
    %528 = vmatprep.subr.mxu0 0.0
    %529 = vmatpush2.msra.mxu0 0.0
    %530 = vmatprep.mubr.f32.mxu0 0.0
    %531 = vmatmul.mubr.f32.gmra.mxu0 %v461
    %v532 = vpop.f32.mrf.mxu0
    %v533 = vadd.f32 0.0, %v532
    %v534 = vpop.f32.mrf.mxu0
    %535 = vmatprep.mubr.f32.mxu0 0.0
    %536 = vmatmul.mubr.f32.gmra.mxu0 %v464
    %v537 = vpop.f32.mrf.mxu0
    %v538 = vadd.f32 0.0, %v537
    %v539 = vpop.f32.mrf.mxu0
    %540 = vdwg.mxu0
    %v541 = vsel %vm136, %v533, 0.0
    %v542 = vsel %vm136, %v538, 0.0
    %v543 = vadd.f32 %v541, %v542
    %v544 = vrot.slane %v543, 4
    %v545 = vadd.f32 %v543, %v544
    %v546 = vrot.slane %v545, 2
    %v547 = vadd.f32 %v545, %v546
    %v548 = vrot.slane %v547, 1
    %v549 = vadd.f32 %v547, %v548
    %v550 = vmul.f32 %v533, %v533
    %v551 = vmul.f32 %v538, %v538
    %v552 = vsel %vm136, %v550, 0.0
    %v553 = vsel %vm136, %v551, 0.0
    %v554 = vadd.f32 %v552, %v553
    %v555 = vrot.slane %v554, 4
    %v556 = vadd.f32 %v554, %v555
    %v557 = vrot.slane %v556, 2
    %v558 = vadd.f32 %v556, %v557
    %v559 = vrot.slane %v558, 1
    %v560 = vadd.f32 %v558, %v559
    %v561 = vmul.f32 %v549, 0.0625
    %v562 = vmul.f32 %v560, 0.0625
    %v563 = vmul.f32 %v561, %v561
    %v564 = vsub.f32 %v562, %v563
    %v565 = vmax.f32 %v564, 0.0
    %v566 = vsub.f32 %v533, %v561
    %v567 = vsub.f32 %v538, %v561
    %v568 = vadd.f32 %v565, 1e-05
    %v569 = vrsqrt.pop %v568
    %v570 = vmul.f32 %v566, %v569
    %v571 = vmul.f32 %v567, %v569
    %v572 = vxor.u32 %v570, 2147483648
    %v573 = vxor.u32 %v571, 2147483648
    %v574 = vmul.f32 %v572, 1.442695
    %v575 = vpow.pop %v574
    %v576 = vmul.f32 %v573, 1.442695
    %v577 = vpow.pop %v576
    %v578 = vadd.f32 %v575, 1.0
    %v579 = vadd.f32 %v577, 1.0
    %v580 = vrcp.pop %v578
    %v581 = vmul.f32 1.0, %v580
    %v582 = vrcp.pop %v579
    %v583 = vmul.f32 1.0, %v582
    %v584 = vmul.f32 %v570, %v581
    %v585 = vmul.f32 %v571, %v583
    %v586 = vld [vmem:[%s3] sm:$0x1]
    %v588 = vlaneseq
    %v589 = vshrl.u32 %v588, 7
    %v590 = vsub.s32 0, %v589
    %v591 = vrot.slane %v586, %v590
    %v593 = vmul.f32 %v584, %v591
    %v594 = vmul.f32 %v585, %v591
    %v595 = vsel %vm136, %v593, 0.0
    %596 = vadd.xlane.f32.xlu0 %v595
    %v597 = vpop.xlane.xlu0 %596
    %v598 = vsel %vm136, %v594, 0.0
    %599 = vadd.xlane.f32.xlu0 %v598
    %v600 = vpop.xlane.xlu0 %599
    %s601 = sld [smem:[#allocation2]]
    %v602 = vstv %s601
    %v603 = vadd.f32 %v597, %v602
    %v604 = vadd.f32 %v600, %v602
    %vm605 = vcmask 7168
    %606 = vst.msk [vmem:[%s5] sm:$0xff] %vm605, %v603
    %607 = vst.msk [vmem:[%s5 + $0x8] sm:$0xff] %vm605, %v604
    // Predicated region
    $region26: #{tpu_custom_call.1} parent=1 // pred_check
      _
    $region27: #{tpu_custom_call.1} parent=1 // pred_check_branch
      %609 = sbr.rel (0) target = $region29
    $region28: #{tpu_custom_call.1} parent=1 // pred_region
      _
    $region29: #{tpu_custom_call.1} parent=1 // pred_fallthru
      _
    // Predicated region
    $region30: #{tpu_custom_call.1} parent=1 // pred_check
      _
    $region31: #{tpu_custom_call.1} parent=1 // pred_check_branch
      %611 = sbr.rel (0) target = $region33
    $region32: #{tpu_custom_call.1} parent=1 // pred_region
      _
    $region33: #{tpu_custom_call.1} parent=1 // pred_fallthru
      _
    %612 = vsyncpa [#allocation4], 1

</llo_original>
